<compile_context>
chip_gen: v7x
topology: tpu7x:2x2x1
jax: 0.10.0
libtpu: 0.0.40
codegen_flags: <defaults>
</compile_context>

<pallas_src>
import jax
import jax.numpy as jnp
from jax import lax
from jax.experimental import pallas as pl
from jax.experimental.pallas import tpu as pltpu


def attention_kernel(h_ref, e_ref, W_ref, bW_ref, U_ref, bU_ref, v_ref, o_ref):
    """All hot-path compute (matmuls, tanh, softmax, weighted sum) in-kernel.

    h_ref  : (B, H)    hidden (query)
    e_ref  : (B, S, H) encoder outputs (keys/values)
    W_ref  : (H, H)    nn.Linear weight (PyTorch layout: y = x @ W.T + b)
    bW_ref : (1, H)
    U_ref  : (H, H)
    bU_ref : (1, H)
    v_ref  : (1, H)
    o_ref  : (B, H)    context vector output
    """
    B, S, H = e_ref.shape

    h = h_ref[...]            # (B, H)
    e = e_ref[...]            # (B, S, H)
    W = W_ref[...]            # (H, H)
    U = U_ref[...]            # (H, H)
    bW = bW_ref[...]          # (1, H)
    bU = bU_ref[...]          # (1, H)
    v = v_ref[...]            # (1, H)

    # Contract on the LAST dim of the weights (== x @ W.T): no explicit .T, so
    # no XLU transpose is materialized — the MXU takes the weight as stored.
    dn = (((1,), (1,)), ((), ()))

    # One batched MXU push each (rows = B and B*S) instead of B tiny dots.
    Wh = lax.dot_general(h, W, dn,
                         preferred_element_type=jnp.float32,
                         precision=lax.Precision.HIGHEST) + bW             # (B, H)
    Ue = lax.dot_general(e.reshape(B * S, H), U, dn,
                         preferred_element_type=jnp.float32,
                         precision=lax.Precision.HIGHEST) + bU             # (B*S, H)

    # tanh(W(h) + U(e)); broadcast query over the sequence dim.
    score = jnp.tanh(Wh[:, None, :] + Ue.reshape(B, S, H))                 # (B, S, H)

    # Logits with seq on the lane axis: contract the feature dim -> (B, S).
    logits = jnp.sum(score * v, axis=-1)                                   # (B, S)

    # Softmax over the sequence dim (PyTorch dim=1) as lane reductions.
    m = jnp.max(logits, axis=-1, keepdims=True)
    ex = jnp.exp(logits - m)
    w = ex / jnp.sum(ex, axis=-1, keepdims=True)                           # (B, S)

    # context = sum_s w[b,s] * e[b,s,:] — VPU multiply + sublane reduce;
    # no per-batch matmul, no w.T transpose.
    ctx = jnp.sum(w[:, :, None] * e, axis=1)                               # (B, H)

    # Single lane-dense store of the full output tile.
    o_ref[...] = ctx.astype(o_ref.dtype)


def attention_forward(hidden, encoder_outputs, W, bW, U, bU, v):
    B, H = hidden.shape
    # Everything is tiny -> single kernel invocation, all operands VMEM-resident.
    # TODO(synk): in a real decode loop, fuse this into the per-timestep kernel
    # (or use cross-call weight residency) so W/U/biases aren't re-DMA'd per step.
    vmem = pl.BlockSpec(memory_space=pltpu.MemorySpace.VMEM)
    return pl.pallas_call(
        attention_kernel,
        out_shape=jax.ShapeDtypeStruct((B, H), jnp.float32),
        in_specs=[vmem] * 7,
        out_specs=vmem,
    )(
        hidden,
        encoder_outputs,
        W,
        bW.reshape(1, H),
        U,
        bU.reshape(1, H),
        v.reshape(1, H),
    )


def attention_reference(hidden, encoder_outputs, W, bW, U, bU, v):
    """Pure-JAX reference mirroring the PyTorch forward."""
    Wh = hidden @ W.T + bW                        # (B, H)
    Ue = encoder_outputs @ U.T + bU               # (B, S, H)
    score = jnp.tanh(Wh[:, None, :] + Ue)         # (B, S, H)
    logits = jnp.einsum("bsh,h->bs", score, v)    # (B, S)
    w = jax.nn.softmax(logits, axis=1)            # (B, S)
    return jnp.sum(w[:, :, None] * encoder_outputs, axis=1)  # (B, H)


if __name__ == "__main__":
    B, S, H = 2, 8, 32

    key = jax.random.PRNGKey(0)
    k_h, k_e, k_W, k_bW, k_U, k_bU, k_v = jax.random.split(key, 7)

    # Deterministic synthetic parameters (nn.Linear-style init scale; v ~ randn).
    bound = 1.0 / jnp.sqrt(H)
    W = jax.random.uniform(k_W, (H, H), jnp.float32, -bound, bound)
    bW = jax.random.uniform(k_bW, (H,), jnp.float32, -bound, bound)
    U = jax.random.uniform(k_U, (H, H), jnp.float32, -bound, bound)
    bU = jax.random.uniform(k_bU, (H,), jnp.float32, -bound, bound)
    v = jax.random.normal(k_v, (H,), jnp.float32)

    hidden = jax.random.normal(k_h, (B, H), jnp.float32)
    encoder_outputs = jax.random.normal(k_e, (B, S, H), jnp.float32)

    out = attention_forward(hidden, encoder_outputs, W, bW, U, bU, v)
    out = jax.block_until_ready(out)

    ref = attention_reference(hidden, encoder_outputs, W, bW, U, bU, v)
    assert out.shape == (B, H)
    assert jnp.allclose(out, ref, atol=1e-5, rtol=1e-5), "mismatch vs reference"

    print("KERNEL_OK")
</pallas_src>

<mosaic_0001>
module attributes {stable_mosaic.version = 11 : i64} {
  func.func @attention_kernel(%arg0: memref<2x32xf32, #tpu.memory_space<vmem>>, %arg1: memref<2x8x32xf32, #tpu.memory_space<vmem>>, %arg2: memref<32x32xf32, #tpu.memory_space<vmem>>, %arg3: memref<1x32xf32, #tpu.memory_space<vmem>>, %arg4: memref<32x32xf32, #tpu.memory_space<vmem>>, %arg5: memref<1x32xf32, #tpu.memory_space<vmem>>, %arg6: memref<1x32xf32, #tpu.memory_space<vmem>>, %arg7: memref<2x32xf32, #tpu.memory_space<vmem>>) attributes {dimension_semantics = [], scalar_prefetch = 0 : i64, scratch_operands = 0 : i64, tpu.core_type = #tpu.core_type<tc>} {
    %c0 = arith.constant 0 : index
    %c0_0 = arith.constant 0 : index
    %0 = vector.load %arg0[%c0, %c0_0] : memref<2x32xf32, #tpu.memory_space<vmem>>, vector<2x32xf32>
    %c0_1 = arith.constant 0 : index
    %c0_2 = arith.constant 0 : index
    %c0_3 = arith.constant 0 : index
    %1 = vector.load %arg1[%c0_1, %c0_2, %c0_3] : memref<2x8x32xf32, #tpu.memory_space<vmem>>, vector<2x8x32xf32>
    %c0_4 = arith.constant 0 : index
    %c0_5 = arith.constant 0 : index
    %2 = vector.load %arg2[%c0_4, %c0_5] : memref<32x32xf32, #tpu.memory_space<vmem>>, vector<32x32xf32>
    %c0_6 = arith.constant 0 : index
    %c0_7 = arith.constant 0 : index
    %3 = vector.load %arg4[%c0_6, %c0_7] : memref<32x32xf32, #tpu.memory_space<vmem>>, vector<32x32xf32>
    %c0_8 = arith.constant 0 : index
    %c0_9 = arith.constant 0 : index
    %4 = vector.load %arg3[%c0_8, %c0_9] : memref<1x32xf32, #tpu.memory_space<vmem>>, vector<1x32xf32>
    %c0_10 = arith.constant 0 : index
    %c0_11 = arith.constant 0 : index
    %5 = vector.load %arg5[%c0_10, %c0_11] : memref<1x32xf32, #tpu.memory_space<vmem>>, vector<1x32xf32>
    %c0_12 = arith.constant 0 : index
    %c0_13 = arith.constant 0 : index
    %6 = vector.load %arg6[%c0_12, %c0_13] : memref<1x32xf32, #tpu.memory_space<vmem>>, vector<1x32xf32>
    %cst = arith.constant dense<0.000000e+00> : vector<2x32xf32>
    %7 = tpu.matmul %0, %2, %cst {dimension_numbers = #tpu.dot_dimension_numbers<[1], [1], [0], [0], [0, 0, 1, 0], [], []>, precision = #tpu.contract_precision<fp32>} : vector<2x32xf32>, vector<32x32xf32>, vector<2x32xf32> -> vector<2x32xf32>
    %8 = vector.broadcast %4 : vector<1x32xf32> to vector<2x32xf32>
    %9 = arith.addf %7, %8 : vector<2x32xf32>
    %10 = vector.shape_cast %1 : vector<2x8x32xf32> to vector<16x32xf32>
    %cst_14 = arith.constant dense<0.000000e+00> : vector<16x32xf32>
    %11 = tpu.matmul %10, %3, %cst_14 {dimension_numbers = #tpu.dot_dimension_numbers<[1], [1], [0], [0], [0, 0, 1, 0], [], []>, precision = #tpu.contract_precision<fp32>} : vector<16x32xf32>, vector<32x32xf32>, vector<16x32xf32> -> vector<16x32xf32>
    %12 = vector.broadcast %5 : vector<1x32xf32> to vector<16x32xf32>
    %13 = arith.addf %11, %12 : vector<16x32xf32>
    %14 = vector.shape_cast %9 : vector<2x32xf32> to vector<2x1x32xf32>
    %15 = vector.shape_cast %13 : vector<16x32xf32> to vector<2x8x32xf32>
    %16 = vector.broadcast %14 : vector<2x1x32xf32> to vector<2x8x32xf32>
    %17 = arith.addf %16, %15 : vector<2x8x32xf32>
    %18 = math.tanh %17 : vector<2x8x32xf32>
    %19 = vector.shape_cast %6 : vector<1x32xf32> to vector<1x1x32xf32>
    %20 = vector.broadcast %19 : vector<1x1x32xf32> to vector<2x8x32xf32>
    %21 = arith.mulf %18, %20 : vector<2x8x32xf32>
    %cst_15 = arith.constant dense<0.000000e+00> : vector<2x8xf32>
    %22 = vector.multi_reduction <add>, %21, %cst_15 [2] : vector<2x8x32xf32> to vector<2x8xf32>
    %cst_16 = arith.constant dense<0xFF800000> : vector<2xf32>
    %23 = vector.multi_reduction <maximumf>, %22, %cst_16 [1] : vector<2x8xf32> to vector<2xf32>
    %24 = vector.shape_cast %23 : vector<2xf32> to vector<2x1xf32>
    %25 = vector.broadcast %24 : vector<2x1xf32> to vector<2x8xf32>
    %26 = arith.subf %22, %25 : vector<2x8xf32>
    %27 = math.exp %26 : vector<2x8xf32>
    %cst_17 = arith.constant dense<0.000000e+00> : vector<2xf32>
    %28 = vector.multi_reduction <add>, %27, %cst_17 [1] : vector<2x8xf32> to vector<2xf32>
    %29 = vector.shape_cast %28 : vector<2xf32> to vector<2x1xf32>
    %30 = vector.broadcast %29 : vector<2x1xf32> to vector<2x8xf32>
    %31 = arith.divf %27, %30 : vector<2x8xf32>
    %32 = vector.shape_cast %31 : vector<2x8xf32> to vector<2x8x1xf32>
    %33 = vector.broadcast %32 : vector<2x8x1xf32> to vector<2x8x32xf32>
    %34 = arith.mulf %33, %1 : vector<2x8x32xf32>
    %cst_18 = arith.constant dense<0.000000e+00> : vector<2x32xf32>
    %35 = vector.multi_reduction <add>, %34, %cst_18 [1] : vector<2x8x32xf32> to vector<2x32xf32>
    %c0_19 = arith.constant 0 : index
    %c0_20 = arith.constant 0 : index
    %36 = vector.load %arg7[%c0_19, %c0_20] : memref<2x32xf32, #tpu.memory_space<vmem>>, vector<2x32xf32>
    tpu.vector_store %arg7[%c0_19, %c0_20], %35 {strides = array<i32>} : memref<2x32xf32, #tpu.memory_space<vmem>>, vector<2x32xf32>,
    return
  }
}

</mosaic_0001>

<llo_original>
// kernel: tpu_custom_call.1
$region0: #{tpu_custom_call.1}
  #allocation0 [shape = 'u32[]', space=smem, size = 0x4, offset = 0x4, fixed_abs, tag = 'smem constant byte address 0x4 - core index']
  #allocation1 [shape = 'u32[144,128]{1,0:T(1,128)}', space=vmem, size = 0x12000, scoped, tag = 'internal scratch']
  %s0 = inlined_call_operand.hbm [shape: f32[2,32], index: 0, kind: input, shape index: {}]
  %s1 = inlined_call_operand.hbm [shape: f32[2,8,32], index: 1, kind: input, shape index: {}]
  %s2 = inlined_call_operand.hbm [shape: f32[32,32], index: 2, kind: input, shape index: {}]
  %s3 = inlined_call_operand.vmem [shape: f32[1,32], index: 3, kind: input, shape index: {}]
  %s4 = inlined_call_operand.hbm [shape: f32[32,32], index: 4, kind: input, shape index: {}]
  %s5 = inlined_call_operand.vmem [shape: f32[1,32], index: 5, kind: input, shape index: {}]
  %s6 = inlined_call_operand.vmem [shape: f32[1,32], index: 6, kind: input, shape index: {}]
  %s7 = inlined_call_operand.hbm [shape: f32[2,32], index: 7, kind: output, shape index: {}]
  %s8 = sld [smem:[#allocation0]]
  $region54: #{tpu_custom_call.1} parent=0
    _
  %s10 = ssub.s32 1, %s8
  %s11 = scalar_select 0, %s10, %s8
  $region1: #{tpu_custom_call.1} parent=0
    #allocation2 [shape = 'u8[1024]{0}', space=vmem, size = 0x400, scoped, tag = 'input window, operand 0, single buffered']
    #allocation3 [shape = 's32[1]{0}', space=sflag, size = 0x4, scoped, tag = 'scoped memory for tpu_custom_call.1']
    #allocation4 [shape = 's32[1]{0}', space=sflag, size = 0x4, scoped, tag = 'scoped memory for tpu_custom_call.1']
    #allocation5 [shape = 'u8[8192]{0}', space=vmem, size = 0x2000, scoped, tag = 'input window, operand 1, single buffered']
    #allocation6 [shape = 's32[1]{0}', space=sflag, size = 0x4, scoped, tag = 'scoped memory for tpu_custom_call.1']
    #allocation7 [shape = 'u8[16384]{0}', space=vmem, size = 0x4000, scoped, tag = 'input window, operand 2, single buffered']
    #allocation8 [shape = 'u8[16384]{0}', space=vmem, size = 0x4000, scoped, tag = 'input window, operand 4, single buffered']
    #allocation9 [shape = 's32[1]{0}', space=sflag, size = 0x4, scoped, tag = 'scoped memory for tpu_custom_call.1']
    #allocation10 [shape = 'u8[1024]{0}', space=vmem, size = 0x400, scoped, tag = 'output window, operand 0, single buffered']
    %12 = vsyncpa [#allocation3], 0
    %13 = vsyncpa [#allocation6], 0
    %14 = vsyncpa [#allocation9], 0
    %15 = vsyncpa [#allocation4], 0
    // Predicated region
    $region2: #{tpu_custom_call.1} parent=1 // pred_check
      _
    $region3: #{tpu_custom_call.1} parent=1 // pred_check_branch
      %17 = sbr.rel (0) target = $region5
    $region4: #{tpu_custom_call.1} parent=1 // pred_region
      %s19 = ssub.s32 32, 32
      %20 = vsyncadd [#allocation3], %s19
      %s22 = sshll.u32 [#allocation2], 4
      %s23 = int_to_ptr.vmem [resolvable:$true] %s22
      %25 = dma.hbm_to_vmem [thread:$0]  %s0, 32, %s23, [#allocation3]
    $region5: #{tpu_custom_call.1} parent=1 // pred_fallthru
      _
    // Predicated region
    $region6: #{tpu_custom_call.1} parent=1 // pred_check
      _
    $region7: #{tpu_custom_call.1} parent=1 // pred_check_branch
      %27 = sbr.rel (0) target = $region9
    $region8: #{tpu_custom_call.1} parent=1 // pred_region
      %s29 = ssub.s32 256, 256
      %30 = vsyncadd [#allocation6], %s29
      %s31 = sshll.u32 [#allocation5], 4
      %s32 = int_to_ptr.vmem [resolvable:$true] %s31
      %37 = dma.hbm_to_vmem [thread:$0]  %s1, 256, %s32, [#allocation6], 128, 128, 8
    $region9: #{tpu_custom_call.1} parent=1 // pred_fallthru
      _
    // Predicated region
    $region10: #{tpu_custom_call.1} parent=1 // pred_check
      _
    $region11: #{tpu_custom_call.1} parent=1 // pred_check_branch
      %39 = sbr.rel (0) target = $region13
    $region12: #{tpu_custom_call.1} parent=1 // pred_region
      %s41 = ssub.s32 512, 512
      %42 = vsyncadd [#allocation6], %s41
      %s43 = sshll.u32 [#allocation7], 4
      %s44 = int_to_ptr.vmem [resolvable:$true] %s43
      %49 = dma.hbm_to_vmem [thread:$0]  %s2, 512, %s44, [#allocation6], 128, 128, 8
    $region13: #{tpu_custom_call.1} parent=1 // pred_fallthru
      _
    // Predicated region
    $region14: #{tpu_custom_call.1} parent=1 // pred_check
      _
    $region15: #{tpu_custom_call.1} parent=1 // pred_check_branch
      %51 = sbr.rel (0) target = $region17
    $region16: #{tpu_custom_call.1} parent=1 // pred_region
      _
    $region17: #{tpu_custom_call.1} parent=1 // pred_fallthru
      _
    // Predicated region
    $region18: #{tpu_custom_call.1} parent=1 // pred_check
      _
    $region19: #{tpu_custom_call.1} parent=1 // pred_check_branch
      %53 = sbr.rel (0) target = $region21
    $region20: #{tpu_custom_call.1} parent=1 // pred_region
      %s55 = ssub.s32 512, 512
      %56 = vsyncadd [#allocation9], %s55
      %s57 = sshll.u32 [#allocation8], 4
      %s58 = int_to_ptr.vmem [resolvable:$true] %s57
      %63 = dma.hbm_to_vmem [thread:$0]  %s4, 512, %s58, [#allocation9], 128, 128, 8
    $region21: #{tpu_custom_call.1} parent=1 // pred_fallthru
      _
    // Predicated region
    $region22: #{tpu_custom_call.1} parent=1 // pred_check
      _
    $region23: #{tpu_custom_call.1} parent=1 // pred_check_branch
      %65 = sbr.rel (0) target = $region25
    $region24: #{tpu_custom_call.1} parent=1 // pred_region
      _
    $region25: #{tpu_custom_call.1} parent=1 // pred_fallthru
      _
    // Predicated region
    $region26: #{tpu_custom_call.1} parent=1 // pred_check
      _
    $region27: #{tpu_custom_call.1} parent=1 // pred_check_branch
      %67 = sbr.rel (0) target = $region29
    $region28: #{tpu_custom_call.1} parent=1 // pred_region
      _
    $region29: #{tpu_custom_call.1} parent=1 // pred_fallthru
      _
    // Predicated region
    $region30: #{tpu_custom_call.1} parent=1 // pred_check
      _
    $region31: #{tpu_custom_call.1} parent=1 // pred_check_branch
      %69 = sbr.rel (0) target = $region33
    $region32: #{tpu_custom_call.1} parent=1 // pred_region
      %70 = dma.done [#allocation3], 32
    $region33: #{tpu_custom_call.1} parent=1 // pred_fallthru
      _
    // Predicated region
    $region34: #{tpu_custom_call.1} parent=1 // pred_check
      _
    $region35: #{tpu_custom_call.1} parent=1 // pred_check_branch
      %72 = sbr.rel (0) target = $region37
    $region36: #{tpu_custom_call.1} parent=1 // pred_region
      %73 = dma.done [#allocation6], 256
    $region37: #{tpu_custom_call.1} parent=1 // pred_fallthru
      _
    // Predicated region
    $region38: #{tpu_custom_call.1} parent=1 // pred_check
      _
    $region39: #{tpu_custom_call.1} parent=1 // pred_check_branch
      %75 = sbr.rel (0) target = $region41
    $region40: #{tpu_custom_call.1} parent=1 // pred_region
      %76 = dma.done [#allocation6], 512
    $region41: #{tpu_custom_call.1} parent=1 // pred_fallthru
      _
    // Predicated region
    $region42: #{tpu_custom_call.1} parent=1 // pred_check
      _
    $region43: #{tpu_custom_call.1} parent=1 // pred_check_branch
      %78 = sbr.rel (0) target = $region45
    $region44: #{tpu_custom_call.1} parent=1 // pred_region
      %79 = dma.done [#allocation9], 512
    $region45: #{tpu_custom_call.1} parent=1 // pred_fallthru
      _
    %v80 = vld [vmem:[#allocation2] sm:$0x3]
    %v81 = vld [vmem:[#allocation5] sm:$0xff]
    %v82 = vld [vmem:[#allocation5 + $0x8] sm:$0xff]
    %v83 = vld [vmem:[#allocation7] sm:$0xff]
    %v84 = vld [vmem:[#allocation7 + $0x8] sm:$0xff]
    %v85 = vld [vmem:[#allocation7 + $0x10] sm:$0xff]
    %v86 = vld [vmem:[#allocation7 + $0x18] sm:$0xff]
    %v87 = vld [vmem:[#allocation8] sm:$0xff]
    %v88 = vld [vmem:[#allocation8 + $0x8] sm:$0xff]
    %v89 = vld [vmem:[#allocation8 + $0x10] sm:$0xff]
    %v90 = vld [vmem:[#allocation8 + $0x18] sm:$0xff]
    %v91 = vld [vmem:[%s3] sm:$0x1]
    %v92 = vld [vmem:[%s5] sm:$0x1]
    %v93 = vld [vmem:[%s6] sm:$0x1]
    %v95 = vlaneseq
    %v96 = vshrl.u32 %v95, 7
    %v97 = vsub.s32 0, %v96
    %v98 = vrot.slane %v91, %v97
    %vm100 = vcmask 261120
    %v102 = vsel %vm100, %v80, 0
    %v105 = vsel %vm100, %v83, 0
    %v108 = vsel %vm100, %v84, 0
    %v111 = vsel %vm100, %v85, 0
    %v114 = vsel %vm100, %v86, 0
    %116 = vmatprep.subr.mxu0 0.0
    %v117 = vand.u32 %v105, 4294901760
    %118 = vmatpush1.xpose.msra.mxu0 %v117
    %119 = vmatprep.subr.mxu0 0.0
    %v120 = vand.u32 %v108, 4294901760
    %121 = vmatpush1.xpose.msra.mxu0 %v120
    %122 = vmatprep.subr.mxu0 0.0
    %v123 = vand.u32 %v111, 4294901760
    %124 = vmatpush1.xpose.msra.mxu0 %v123
    %125 = vmatprep.subr.mxu0 0.0
    %v126 = vand.u32 %v114, 4294901760
    %127 = vmatpush1.xpose.msra.mxu0 %v126
    %128 = vmatprep.subr.mxu0 0.0
    %129 = vmatpush1.xpose.msra.mxu0 0.0
    %130 = vmatprep.subr.mxu0 0.0
    %131 = vmatpush1.xpose.msra.mxu0 0.0
    %132 = vmatprep.subr.mxu0 0.0
    %133 = vmatpush1.xpose.msra.mxu0 0.0
    %134 = vmatprep.subr.mxu0 0.0
    %135 = vmatpush1.xpose.msra.mxu0 0.0
    %136 = vmatprep.subr.mxu0 0.0
    %137 = vmatpush1.xpose.msra.mxu0 0.0
    %138 = vmatprep.subr.mxu0 0.0
    %139 = vmatpush1.xpose.msra.mxu0 0.0
    %140 = vmatprep.subr.mxu0 0.0
    %141 = vmatpush1.xpose.msra.mxu0 0.0
    %142 = vmatprep.subr.mxu0 0.0
    %143 = vmatpush1.xpose.msra.mxu0 0.0
    %144 = vmatprep.subr.mxu0 0.0
    %145 = vmatpush1.xpose.msra.mxu0 0.0
    %146 = vmatprep.subr.mxu0 0.0
    %147 = vmatpush1.xpose.msra.mxu0 0.0
    %148 = vmatprep.subr.mxu0 0.0
    %149 = vmatpush1.xpose.msra.mxu0 0.0
    %150 = vmatprep.subr.mxu0 0.0
    %151 = vmatpush1.xpose.msra.mxu0 0.0
    %152 = vmatprep.subr.mxu0 0.0
    %153 = vmatpush1.xpose.msra.mxu0 0.0
    %154 = vmatprep.subr.mxu0 0.0
    %155 = vmatpush1.xpose.msra.mxu0 0.0
    %156 = vmatprep.subr.mxu0 0.0
    %157 = vmatpush1.xpose.msra.mxu0 0.0
    %158 = vmatprep.subr.mxu0 0.0
    %159 = vmatpush1.xpose.msra.mxu0 0.0
    %160 = vmatprep.subr.mxu0 0.0
    %161 = vmatpush1.xpose.msra.mxu0 0.0
    %162 = vmatprep.subr.mxu0 0.0
    %163 = vmatpush1.xpose.msra.mxu0 0.0
    %164 = vmatprep.subr.mxu0 0.0
    %165 = vmatpush1.xpose.msra.mxu0 0.0
    %166 = vmatprep.subr.mxu0 0.0
    %167 = vmatpush1.xpose.msra.mxu0 0.0
    %168 = vmatprep.subr.mxu0 0.0
    %169 = vmatpush1.xpose.msra.mxu0 0.0
    %170 = vmatprep.subr.mxu0 0.0
    %171 = vmatpush1.xpose.msra.mxu0 0.0
    %172 = vmatprep.subr.mxu0 0.0
    %173 = vmatpush1.xpose.msra.mxu0 0.0
    %174 = vmatprep.subr.mxu0 0.0
    %175 = vmatpush1.xpose.msra.mxu0 0.0
    %176 = vmatprep.subr.mxu0 0.0
    %177 = vmatpush1.xpose.msra.mxu0 0.0
    %178 = vmatprep.subr.mxu0 0.0
    %179 = vmatpush1.xpose.msra.mxu0 0.0
    %180 = vmatprep.subr.mxu0 0.0
    %181 = vmatpush1.xpose.msra.mxu0 0.0
    %182 = vmatprep.subr.mxu0 0.0
    %183 = vmatpush1.xpose.msra.mxu0 0.0
    %184 = vmatprep.mubr.f32.mxu0 0.0
    %v185 = vand.u32 %v102, 4294901760
    %v186 = vsub.f32 %v102, %v185
    %v187 = vand.u32 %v186, 4294901760
    %v188 = vsub.f32 %v186, %v187
    %v189 = vand.u32 %v188, 4294901760
    %190 = vmatmul.mubr.f32.gmra.mrb[0].mxu0 %v189
    %v191 = vpop.f32.mrb[0].mxu0
    %v192 = vadd.f32 %v98, %v191
    %v193 = vpop.f32.mrb[0].mxu0
    %194 = vdwg.mxu0
    %195 = vmatprep.subr.mxu0 0.0
    %v196 = vand.u32 %v105, 4294901760
    %v197 = vsub.f32 %v105, %v196
    %v198 = vand.u32 %v197, 4294901760
    %v199 = vsub.f32 %v197, %v198
    %v200 = vand.u32 %v199, 4294901760
    %201 = vmatpush1.xpose.msra.mxu0 %v200
    %202 = vmatprep.subr.mxu0 0.0
    %v203 = vand.u32 %v108, 4294901760
    %v204 = vsub.f32 %v108, %v203
    %v205 = vand.u32 %v204, 4294901760
    %v206 = vsub.f32 %v204, %v205
    %v207 = vand.u32 %v206, 4294901760
    %208 = vmatpush1.xpose.msra.mxu0 %v207
    %209 = vmatprep.subr.mxu0 0.0
    %v210 = vand.u32 %v111, 4294901760
    %v211 = vsub.f32 %v111, %v210
    %v212 = vand.u32 %v211, 4294901760
    %v213 = vsub.f32 %v211, %v212
    %v214 = vand.u32 %v213, 4294901760
    %215 = vmatpush1.xpose.msra.mxu0 %v214
    %216 = vmatprep.subr.mxu0 0.0
    %v217 = vand.u32 %v114, 4294901760
    %v218 = vsub.f32 %v114, %v217
    %v219 = vand.u32 %v218, 4294901760
    %v220 = vsub.f32 %v218, %v219
    %v221 = vand.u32 %v220, 4294901760
    %222 = vmatpush1.xpose.msra.mxu0 %v221
    %223 = vmatprep.subr.mxu0 0.0
    %224 = vmatpush1.xpose.msra.mxu0 0.0
    %225 = vmatprep.subr.mxu0 0.0
    %226 = vmatpush1.xpose.msra.mxu0 0.0
    %227 = vmatprep.subr.mxu0 0.0
    %228 = vmatpush1.xpose.msra.mxu0 0.0
    %229 = vmatprep.subr.mxu0 0.0
    %230 = vmatpush1.xpose.msra.mxu0 0.0
    %231 = vmatprep.subr.mxu0 0.0
    %232 = vmatpush1.xpose.msra.mxu0 0.0
    %233 = vmatprep.subr.mxu0 0.0
    %234 = vmatpush1.xpose.msra.mxu0 0.0
    %235 = vmatprep.subr.mxu0 0.0
    %236 = vmatpush1.xpose.msra.mxu0 0.0
    %237 = vmatprep.subr.mxu0 0.0
    %238 = vmatpush1.xpose.msra.mxu0 0.0
    %239 = vmatprep.subr.mxu0 0.0
    %240 = vmatpush1.xpose.msra.mxu0 0.0
    %241 = vmatprep.subr.mxu0 0.0
    %242 = vmatpush1.xpose.msra.mxu0 0.0
    %243 = vmatprep.subr.mxu0 0.0
    %244 = vmatpush1.xpose.msra.mxu0 0.0
    %245 = vmatprep.subr.mxu0 0.0
    %246 = vmatpush1.xpose.msra.mxu0 0.0
    %247 = vmatprep.subr.mxu0 0.0
    %248 = vmatpush1.xpose.msra.mxu0 0.0
    %249 = vmatprep.subr.mxu0 0.0
    %250 = vmatpush1.xpose.msra.mxu0 0.0
    %251 = vmatprep.subr.mxu0 0.0
    %252 = vmatpush1.xpose.msra.mxu0 0.0
    %253 = vmatprep.subr.mxu0 0.0
    %254 = vmatpush1.xpose.msra.mxu0 0.0
    %255 = vmatprep.subr.mxu0 0.0
    %256 = vmatpush1.xpose.msra.mxu0 0.0
    %257 = vmatprep.subr.mxu0 0.0
    %258 = vmatpush1.xpose.msra.mxu0 0.0
    %259 = vmatprep.subr.mxu0 0.0
    %260 = vmatpush1.xpose.msra.mxu0 0.0
    %261 = vmatprep.subr.mxu0 0.0
    %262 = vmatpush1.xpose.msra.mxu0 0.0
    %263 = vmatprep.subr.mxu0 0.0
    %264 = vmatpush1.xpose.msra.mxu0 0.0
    %265 = vmatprep.subr.mxu0 0.0
    %266 = vmatpush1.xpose.msra.mxu0 0.0
    %267 = vmatprep.subr.mxu0 0.0
    %268 = vmatpush1.xpose.msra.mxu0 0.0
    %269 = vmatprep.subr.mxu0 0.0
    %270 = vmatpush1.xpose.msra.mxu0 0.0
    %271 = vmatprep.subr.mxu0 0.0
    %272 = vmatpush1.xpose.msra.mxu0 0.0
    %273 = vmatprep.subr.mxu0 0.0
    %274 = vmatpush1.xpose.msra.mxu0 0.0
    %275 = vmatprep.subr.mxu0 0.0
    %276 = vmatpush1.xpose.msra.mxu0 0.0
    %277 = vmatprep.subr.mxu0 0.0
    %278 = vmatpush1.xpose.msra.mxu0 0.0
    %279 = vmatprep.mubr.f32.mxu0 0.0
    %v280 = vand.u32 %v102, 4294901760
    %281 = vmatmul.mubr.f32.gmra.mrb[0].mxu0 %v280
    %v282 = vpop.f32.mrb[0].mxu0
    %v283 = vadd.f32 %v192, %v282
    %v284 = vpop.f32.mrb[0].mxu0
    %285 = vdwg.mxu0
    %286 = vmatprep.subr.mxu0 0.0
    %v287 = vand.u32 %v105, 4294901760
    %v288 = vsub.f32 %v105, %v287
    %289 = vmatpush1.xpose.msra.mxu0 %v288
    %290 = vmatprep.subr.mxu0 0.0
    %v291 = vand.u32 %v108, 4294901760
    %v292 = vsub.f32 %v108, %v291
    %293 = vmatpush1.xpose.msra.mxu0 %v292
    %294 = vmatprep.subr.mxu0 0.0
    %v295 = vand.u32 %v111, 4294901760
    %v296 = vsub.f32 %v111, %v295
    %297 = vmatpush1.xpose.msra.mxu0 %v296
    %298 = vmatprep.subr.mxu0 0.0
    %v299 = vand.u32 %v114, 4294901760
    %v300 = vsub.f32 %v114, %v299
    %301 = vmatpush1.xpose.msra.mxu0 %v300
    %302 = vmatprep.subr.mxu0 0.0
    %303 = vmatpush1.xpose.msra.mxu0 0.0
    %304 = vmatprep.subr.mxu0 0.0
    %305 = vmatpush1.xpose.msra.mxu0 0.0
    %306 = vmatprep.subr.mxu0 0.0
    %307 = vmatpush1.xpose.msra.mxu0 0.0
    %308 = vmatprep.subr.mxu0 0.0
    %309 = vmatpush1.xpose.msra.mxu0 0.0
    %310 = vmatprep.subr.mxu0 0.0
    %311 = vmatpush1.xpose.msra.mxu0 0.0
    %312 = vmatprep.subr.mxu0 0.0
    %313 = vmatpush1.xpose.msra.mxu0 0.0
    %314 = vmatprep.subr.mxu0 0.0
    %315 = vmatpush1.xpose.msra.mxu0 0.0
    %316 = vmatprep.subr.mxu0 0.0
    %317 = vmatpush1.xpose.msra.mxu0 0.0
    %318 = vmatprep.subr.mxu0 0.0
    %319 = vmatpush1.xpose.msra.mxu0 0.0
    %320 = vmatprep.subr.mxu0 0.0
    %321 = vmatpush1.xpose.msra.mxu0 0.0
    %322 = vmatprep.subr.mxu0 0.0
    %323 = vmatpush1.xpose.msra.mxu0 0.0
    %324 = vmatprep.subr.mxu0 0.0
    %325 = vmatpush1.xpose.msra.mxu0 0.0
    %326 = vmatprep.subr.mxu0 0.0
    %327 = vmatpush1.xpose.msra.mxu0 0.0
    %328 = vmatprep.subr.mxu0 0.0
    %329 = vmatpush1.xpose.msra.mxu0 0.0
    %330 = vmatprep.subr.mxu0 0.0
    %331 = vmatpush1.xpose.msra.mxu0 0.0
    %332 = vmatprep.subr.mxu0 0.0
    %333 = vmatpush1.xpose.msra.mxu0 0.0
    %334 = vmatprep.subr.mxu0 0.0
    %335 = vmatpush1.xpose.msra.mxu0 0.0
    %336 = vmatprep.subr.mxu0 0.0
    %337 = vmatpush1.xpose.msra.mxu0 0.0
    %338 = vmatprep.subr.mxu0 0.0
    %339 = vmatpush1.xpose.msra.mxu0 0.0
    %340 = vmatprep.subr.mxu0 0.0
    %341 = vmatpush1.xpose.msra.mxu0 0.0
    %342 = vmatprep.subr.mxu0 0.0
    %343 = vmatpush1.xpose.msra.mxu0 0.0
    %344 = vmatprep.subr.mxu0 0.0
    %345 = vmatpush1.xpose.msra.mxu0 0.0
    %346 = vmatprep.subr.mxu0 0.0
    %347 = vmatpush1.xpose.msra.mxu0 0.0
    %348 = vmatprep.subr.mxu0 0.0
    %349 = vmatpush1.xpose.msra.mxu0 0.0
    %350 = vmatprep.subr.mxu0 0.0
    %351 = vmatpush1.xpose.msra.mxu0 0.0
    %352 = vmatprep.subr.mxu0 0.0
    %353 = vmatpush1.xpose.msra.mxu0 0.0
    %354 = vmatprep.subr.mxu0 0.0
    %355 = vmatpush1.xpose.msra.mxu0 0.0
    %356 = vmatprep.subr.mxu0 0.0
    %357 = vmatpush1.xpose.msra.mxu0 0.0
    %358 = vmatprep.mubr.f32.mxu0 0.0
    %v359 = vand.u32 %v102, 4294901760
    %v360 = vsub.f32 %v102, %v359
    %361 = vmatmul.mubr.f32.gmra.mrb[0].mxu0 %v360
    %v362 = vpop.f32.mrb[0].mxu0
    %v363 = vadd.f32 %v283, %v362
    %v364 = vpop.f32.mrb[0].mxu0
    %365 = vdwg.mxu0
    %366 = vmatprep.subr.mxu0 0.0
    %v367 = vand.u32 %v105, 4294901760
    %368 = vmatpush1.xpose.msra.mxu0 %v367
    %369 = vmatprep.subr.mxu0 0.0
    %v370 = vand.u32 %v108, 4294901760
    %371 = vmatpush1.xpose.msra.mxu0 %v370
    %372 = vmatprep.subr.mxu0 0.0
    %v373 = vand.u32 %v111, 4294901760
    %374 = vmatpush1.xpose.msra.mxu0 %v373
    %375 = vmatprep.subr.mxu0 0.0
    %v376 = vand.u32 %v114, 4294901760
    %377 = vmatpush1.xpose.msra.mxu0 %v376
    %378 = vmatprep.subr.mxu0 0.0
    %379 = vmatpush1.xpose.msra.mxu0 0.0
    %380 = vmatprep.subr.mxu0 0.0
    %381 = vmatpush1.xpose.msra.mxu0 0.0
    %382 = vmatprep.subr.mxu0 0.0
    %383 = vmatpush1.xpose.msra.mxu0 0.0
    %384 = vmatprep.subr.mxu0 0.0
    %385 = vmatpush1.xpose.msra.mxu0 0.0
    %386 = vmatprep.subr.mxu0 0.0
    %387 = vmatpush1.xpose.msra.mxu0 0.0
    %388 = vmatprep.subr.mxu0 0.0
    %389 = vmatpush1.xpose.msra.mxu0 0.0
    %390 = vmatprep.subr.mxu0 0.0
    %391 = vmatpush1.xpose.msra.mxu0 0.0
    %392 = vmatprep.subr.mxu0 0.0
    %393 = vmatpush1.xpose.msra.mxu0 0.0
    %394 = vmatprep.subr.mxu0 0.0
    %395 = vmatpush1.xpose.msra.mxu0 0.0
    %396 = vmatprep.subr.mxu0 0.0
    %397 = vmatpush1.xpose.msra.mxu0 0.0
    %398 = vmatprep.subr.mxu0 0.0
    %399 = vmatpush1.xpose.msra.mxu0 0.0
    %400 = vmatprep.subr.mxu0 0.0
    %401 = vmatpush1.xpose.msra.mxu0 0.0
    %402 = vmatprep.subr.mxu0 0.0
    %403 = vmatpush1.xpose.msra.mxu0 0.0
    %404 = vmatprep.subr.mxu0 0.0
    %405 = vmatpush1.xpose.msra.mxu0 0.0
    %406 = vmatprep.subr.mxu0 0.0
    %407 = vmatpush1.xpose.msra.mxu0 0.0
    %408 = vmatprep.subr.mxu0 0.0
    %409 = vmatpush1.xpose.msra.mxu0 0.0
    %410 = vmatprep.subr.mxu0 0.0
    %411 = vmatpush1.xpose.msra.mxu0 0.0
    %412 = vmatprep.subr.mxu0 0.0
    %413 = vmatpush1.xpose.msra.mxu0 0.0
    %414 = vmatprep.subr.mxu0 0.0
    %415 = vmatpush1.xpose.msra.mxu0 0.0
    %416 = vmatprep.subr.mxu0 0.0
    %417 = vmatpush1.xpose.msra.mxu0 0.0
    %418 = vmatprep.subr.mxu0 0.0
    %419 = vmatpush1.xpose.msra.mxu0 0.0
    %420 = vmatprep.subr.mxu0 0.0
    %421 = vmatpush1.xpose.msra.mxu0 0.0
    %422 = vmatprep.subr.mxu0 0.0
    %423 = vmatpush1.xpose.msra.mxu0 0.0
    %424 = vmatprep.subr.mxu0 0.0
    %425 = vmatpush1.xpose.msra.mxu0 0.0
    %426 = vmatprep.subr.mxu0 0.0
    %427 = vmatpush1.xpose.msra.mxu0 0.0
    %428 = vmatprep.subr.mxu0 0.0
    %429 = vmatpush1.xpose.msra.mxu0 0.0
    %430 = vmatprep.subr.mxu0 0.0
    %431 = vmatpush1.xpose.msra.mxu0 0.0
    %432 = vmatprep.subr.mxu0 0.0
    %433 = vmatpush1.xpose.msra.mxu0 0.0
    %434 = vmatprep.mubr.f32.mxu0 0.0
    %v435 = vand.u32 %v102, 4294901760
    %v436 = vsub.f32 %v102, %v435
    %v437 = vand.u32 %v436, 4294901760
    %438 = vmatmul.mubr.f32.gmra.mrb[0].mxu0 %v437
    %v439 = vpop.f32.mrb[0].mxu0
    %v440 = vadd.f32 %v363, %v439
    %v441 = vpop.f32.mrb[0].mxu0
    %442 = vdwg.mxu0
    %443 = vmatprep.subr.mxu0 0.0
    %v444 = vand.u32 %v105, 4294901760
    %v445 = vsub.f32 %v105, %v444
    %v446 = vand.u32 %v445, 4294901760
    %447 = vmatpush1.xpose.msra.mxu0 %v446
    %448 = vmatprep.subr.mxu0 0.0
    %v449 = vand.u32 %v108, 4294901760
    %v450 = vsub.f32 %v108, %v449
    %v451 = vand.u32 %v450, 4294901760
    %452 = vmatpush1.xpose.msra.mxu0 %v451
    %453 = vmatprep.subr.mxu0 0.0
    %v454 = vand.u32 %v111, 4294901760
    %v455 = vsub.f32 %v111, %v454
    %v456 = vand.u32 %v455, 4294901760
    %457 = vmatpush1.xpose.msra.mxu0 %v456
    %458 = vmatprep.subr.mxu0 0.0
    %v459 = vand.u32 %v114, 4294901760
    %v460 = vsub.f32 %v114, %v459
    %v461 = vand.u32 %v460, 4294901760
    %462 = vmatpush1.xpose.msra.mxu0 %v461
    %463 = vmatprep.subr.mxu0 0.0
    %464 = vmatpush1.xpose.msra.mxu0 0.0
    %465 = vmatprep.subr.mxu0 0.0
    %466 = vmatpush1.xpose.msra.mxu0 0.0
    %467 = vmatprep.subr.mxu0 0.0
    %468 = vmatpush1.xpose.msra.mxu0 0.0
    %469 = vmatprep.subr.mxu0 0.0
    %470 = vmatpush1.xpose.msra.mxu0 0.0
    %471 = vmatprep.subr.mxu0 0.0
    %472 = vmatpush1.xpose.msra.mxu0 0.0
    %473 = vmatprep.subr.mxu0 0.0
    %474 = vmatpush1.xpose.msra.mxu0 0.0
    %475 = vmatprep.subr.mxu0 0.0
    %476 = vmatpush1.xpose.msra.mxu0 0.0
    %477 = vmatprep.subr.mxu0 0.0
    %478 = vmatpush1.xpose.msra.mxu0 0.0
    %479 = vmatprep.subr.mxu0 0.0
    %480 = vmatpush1.xpose.msra.mxu0 0.0
    %481 = vmatprep.subr.mxu0 0.0
    %482 = vmatpush1.xpose.msra.mxu0 0.0
    %483 = vmatprep.subr.mxu0 0.0
    %484 = vmatpush1.xpose.msra.mxu0 0.0
    %485 = vmatprep.subr.mxu0 0.0
    %486 = vmatpush1.xpose.msra.mxu0 0.0
    %487 = vmatprep.subr.mxu0 0.0
    %488 = vmatpush1.xpose.msra.mxu0 0.0
    %489 = vmatprep.subr.mxu0 0.0
    %490 = vmatpush1.xpose.msra.mxu0 0.0
    %491 = vmatprep.subr.mxu0 0.0
    %492 = vmatpush1.xpose.msra.mxu0 0.0
    %493 = vmatprep.subr.mxu0 0.0
    %494 = vmatpush1.xpose.msra.mxu0 0.0
    %495 = vmatprep.subr.mxu0 0.0
    %496 = vmatpush1.xpose.msra.mxu0 0.0
    %497 = vmatprep.subr.mxu0 0.0
    %498 = vmatpush1.xpose.msra.mxu0 0.0
    %499 = vmatprep.subr.mxu0 0.0
    %500 = vmatpush1.xpose.msra.mxu0 0.0
    %501 = vmatprep.subr.mxu0 0.0
    %502 = vmatpush1.xpose.msra.mxu0 0.0
    %503 = vmatprep.subr.mxu0 0.0
    %504 = vmatpush1.xpose.msra.mxu0 0.0
    %505 = vmatprep.subr.mxu0 0.0
    %506 = vmatpush1.xpose.msra.mxu0 0.0
    %507 = vmatprep.subr.mxu0 0.0
    %508 = vmatpush1.xpose.msra.mxu0 0.0
    %509 = vmatprep.subr.mxu0 0.0
    %510 = vmatpush1.xpose.msra.mxu0 0.0
    %511 = vmatprep.subr.mxu0 0.0
    %512 = vmatpush1.xpose.msra.mxu0 0.0
    %513 = vmatprep.subr.mxu0 0.0
    %514 = vmatpush1.xpose.msra.mxu0 0.0
    %515 = vmatprep.subr.mxu0 0.0
    %516 = vmatpush1.xpose.msra.mxu0 0.0
    %517 = vmatprep.subr.mxu0 0.0
    %518 = vmatpush1.xpose.msra.mxu0 0.0
    %519 = vmatprep.mubr.f32.mxu0 0.0
    %v520 = vand.u32 %v102, 4294901760
    %521 = vmatmul.mubr.f32.gmra.mrb[0].mxu0 %v520
    %v522 = vpop.f32.mrb[0].mxu0
    %v523 = vadd.f32 %v440, %v522
    %v524 = vpop.f32.mrb[0].mxu0
    %525 = vdwg.mxu0
    %526 = vmatprep.subr.mxu0 0.0
    %v527 = vand.u32 %v105, 4294901760
    %528 = vmatpush1.xpose.msra.mxu0 %v527
    %529 = vmatprep.subr.mxu0 0.0
    %v530 = vand.u32 %v108, 4294901760
    %531 = vmatpush1.xpose.msra.mxu0 %v530
    %532 = vmatprep.subr.mxu0 0.0
    %v533 = vand.u32 %v111, 4294901760
    %534 = vmatpush1.xpose.msra.mxu0 %v533
    %535 = vmatprep.subr.mxu0 0.0
    %v536 = vand.u32 %v114, 4294901760
    %537 = vmatpush1.xpose.msra.mxu0 %v536
    %538 = vmatprep.subr.mxu0 0.0
    %539 = vmatpush1.xpose.msra.mxu0 0.0
    %540 = vmatprep.subr.mxu0 0.0
    %541 = vmatpush1.xpose.msra.mxu0 0.0
    %542 = vmatprep.subr.mxu0 0.0
    %543 = vmatpush1.xpose.msra.mxu0 0.0
    %544 = vmatprep.subr.mxu0 0.0
    %545 = vmatpush1.xpose.msra.mxu0 0.0
    %546 = vmatprep.subr.mxu0 0.0
    %547 = vmatpush1.xpose.msra.mxu0 0.0
    %548 = vmatprep.subr.mxu0 0.0
    %549 = vmatpush1.xpose.msra.mxu0 0.0
    %550 = vmatprep.subr.mxu0 0.0
    %551 = vmatpush1.xpose.msra.mxu0 0.0
    %552 = vmatprep.subr.mxu0 0.0
    %553 = vmatpush1.xpose.msra.mxu0 0.0
    %554 = vmatprep.subr.mxu0 0.0
    %555 = vmatpush1.xpose.msra.mxu0 0.0
    %556 = vmatprep.subr.mxu0 0.0
    %557 = vmatpush1.xpose.msra.mxu0 0.0
    %558 = vmatprep.subr.mxu0 0.0
    %559 = vmatpush1.xpose.msra.mxu0 0.0
    %560 = vmatprep.subr.mxu0 0.0
    %561 = vmatpush1.xpose.msra.mxu0 0.0
    %562 = vmatprep.subr.mxu0 0.0
    %563 = vmatpush1.xpose.msra.mxu0 0.0
    %564 = vmatprep.subr.mxu0 0.0
    %565 = vmatpush1.xpose.msra.mxu0 0.0
    %566 = vmatprep.subr.mxu0 0.0
    %567 = vmatpush1.xpose.msra.mxu0 0.0
    %568 = vmatprep.subr.mxu0 0.0
    %569 = vmatpush1.xpose.msra.mxu0 0.0
    %570 = vmatprep.subr.mxu0 0.0
    %571 = vmatpush1.xpose.msra.mxu0 0.0
    %572 = vmatprep.subr.mxu0 0.0
    %573 = vmatpush1.xpose.msra.mxu0 0.0
    %574 = vmatprep.subr.mxu0 0.0
    %575 = vmatpush1.xpose.msra.mxu0 0.0
    %576 = vmatprep.subr.mxu0 0.0
    %577 = vmatpush1.xpose.msra.mxu0 0.0
    %578 = vmatprep.subr.mxu0 0.0
    %579 = vmatpush1.xpose.msra.mxu0 0.0
    %580 = vmatprep.subr.mxu0 0.0
    %581 = vmatpush1.xpose.msra.mxu0 0.0
    %582 = vmatprep.subr.mxu0 0.0
    %583 = vmatpush1.xpose.msra.mxu0 0.0
    %584 = vmatprep.subr.mxu0 0.0
    %585 = vmatpush1.xpose.msra.mxu0 0.0
    %586 = vmatprep.subr.mxu0 0.0
    %587 = vmatpush1.xpose.msra.mxu0 0.0
    %588 = vmatprep.subr.mxu0 0.0
    %589 = vmatpush1.xpose.msra.mxu0 0.0
    %590 = vmatprep.subr.mxu0 0.0
    %591 = vmatpush1.xpose.msra.mxu0 0.0
    %592 = vmatprep.subr.mxu0 0.0
    %593 = vmatpush1.xpose.msra.mxu0 0.0
    %594 = vmatprep.mubr.f32.mxu0 0.0
    %v595 = vand.u32 %v102, 4294901760
    %596 = vmatmul.mubr.f32.gmra.mrb[0].mxu0 %v595
    %v597 = vpop.f32.mrb[0].mxu0
    %v598 = vadd.f32 %v523, %v597
    %v599 = vpop.f32.mrb[0].mxu0
    %600 = vdwg.mxu0
    %v602 = vlaneseq
    %v603 = vshrl.u32 %v602, 7
    %v604 = vsub.s32 0, %v603
    %v605 = vrot.slane %v92, %v604
    %v608 = vsel %vm100, %v81, 0
    %v611 = vsel %vm100, %v82, 0
    %v614 = vsel %vm100, %v87, 0
    %v617 = vsel %vm100, %v88, 0
    %v620 = vsel %vm100, %v89, 0
    %v623 = vsel %vm100, %v90, 0
    %625 = vmatprep.subr.mxu0 0.0
    %v626 = vand.u32 %v614, 4294901760
    %627 = vmatpush1.xpose.msra.mxu0 %v626
    %628 = vmatprep.subr.mxu0 0.0
    %v629 = vand.u32 %v617, 4294901760
    %630 = vmatpush1.xpose.msra.mxu0 %v629
    %631 = vmatprep.subr.mxu0 0.0
    %v632 = vand.u32 %v620, 4294901760
    %633 = vmatpush1.xpose.msra.mxu0 %v632
    %634 = vmatprep.subr.mxu0 0.0
    %v635 = vand.u32 %v623, 4294901760
    %636 = vmatpush1.xpose.msra.mxu0 %v635
    %637 = vmatprep.subr.mxu0 0.0
    %638 = vmatpush1.xpose.msra.mxu0 0.0
    %639 = vmatprep.subr.mxu0 0.0
    %640 = vmatpush1.xpose.msra.mxu0 0.0
    %641 = vmatprep.subr.mxu0 0.0
    %642 = vmatpush1.xpose.msra.mxu0 0.0
    %643 = vmatprep.subr.mxu0 0.0
    %644 = vmatpush1.xpose.msra.mxu0 0.0
    %645 = vmatprep.subr.mxu0 0.0
    %646 = vmatpush1.xpose.msra.mxu0 0.0
    %647 = vmatprep.subr.mxu0 0.0
    %648 = vmatpush1.xpose.msra.mxu0 0.0
    %649 = vmatprep.subr.mxu0 0.0
    %650 = vmatpush1.xpose.msra.mxu0 0.0
    %651 = vmatprep.subr.mxu0 0.0
    %652 = vmatpush1.xpose.msra.mxu0 0.0
    %653 = vmatprep.subr.mxu0 0.0
    %654 = vmatpush1.xpose.msra.mxu0 0.0
    %655 = vmatprep.subr.mxu0 0.0
    %656 = vmatpush1.xpose.msra.mxu0 0.0
    %657 = vmatprep.subr.mxu0 0.0
    %658 = vmatpush1.xpose.msra.mxu0 0.0
    %659 = vmatprep.subr.mxu0 0.0
    %660 = vmatpush1.xpose.msra.mxu0 0.0
    %661 = vmatprep.subr.mxu0 0.0
    %662 = vmatpush1.xpose.msra.mxu0 0.0
    %663 = vmatprep.subr.mxu0 0.0
    %664 = vmatpush1.xpose.msra.mxu0 0.0
    %665 = vmatprep.subr.mxu0 0.0
    %666 = vmatpush1.xpose.msra.mxu0 0.0
    %667 = vmatprep.subr.mxu0 0.0
    %668 = vmatpush1.xpose.msra.mxu0 0.0
    %669 = vmatprep.subr.mxu0 0.0
    %670 = vmatpush1.xpose.msra.mxu0 0.0
    %671 = vmatprep.subr.mxu0 0.0
    %672 = vmatpush1.xpose.msra.mxu0 0.0
    %673 = vmatprep.subr.mxu0 0.0
    %674 = vmatpush1.xpose.msra.mxu0 0.0
    %675 = vmatprep.subr.mxu0 0.0
    %676 = vmatpush1.xpose.msra.mxu0 0.0
    %677 = vmatprep.subr.mxu0 0.0
    %678 = vmatpush1.xpose.msra.mxu0 0.0
    %679 = vmatprep.subr.mxu0 0.0
    %680 = vmatpush1.xpose.msra.mxu0 0.0
    %681 = vmatprep.subr.mxu0 0.0
    %682 = vmatpush1.xpose.msra.mxu0 0.0
    %683 = vmatprep.subr.mxu0 0.0
    %684 = vmatpush1.xpose.msra.mxu0 0.0
    %685 = vmatprep.subr.mxu0 0.0
    %686 = vmatpush1.xpose.msra.mxu0 0.0
    %687 = vmatprep.subr.mxu0 0.0
    %688 = vmatpush1.xpose.msra.mxu0 0.0
    %689 = vmatprep.subr.mxu0 0.0
    %690 = vmatpush1.xpose.msra.mxu0 0.0
    %691 = vmatprep.subr.mxu0 0.0
    %692 = vmatpush1.xpose.msra.mxu0 0.0
    %693 = vmatprep.mubr.f32.mxu0 0.0
    %v694 = vand.u32 %v608, 4294901760
    %v695 = vsub.f32 %v608, %v694
    %v696 = vand.u32 %v695, 4294901760
    %v697 = vsub.f32 %v695, %v696
    %v698 = vand.u32 %v697, 4294901760
    %699 = vmatmul.mubr.f32.gmra.mrb[0].mxu0 %v698
    %v700 = vpop.f32.mrb[0].mxu0
    %v701 = vadd.f32 %v605, %v700
    %v702 = vpop.f32.mrb[0].mxu0
    %703 = vmatprep.mubr.f32.mxu0 0.0
    %v704 = vand.u32 %v611, 4294901760
    %v705 = vsub.f32 %v611, %v704
    %v706 = vand.u32 %v705, 4294901760
    %v707 = vsub.f32 %v705, %v706
    %v708 = vand.u32 %v707, 4294901760
    %709 = vmatmul.mubr.f32.gmra.mrb[0].mxu0 %v708
    %v710 = vpop.f32.mrb[0].mxu0
    %v711 = vadd.f32 %v605, %v710
    %v712 = vpop.f32.mrb[0].mxu0
    %713 = vdwg.mxu0
    %714 = vmatprep.subr.mxu0 0.0
    %v715 = vand.u32 %v614, 4294901760
    %v716 = vsub.f32 %v614, %v715
    %v717 = vand.u32 %v716, 4294901760
    %v718 = vsub.f32 %v716, %v717
    %v719 = vand.u32 %v718, 4294901760
    %720 = vmatpush1.xpose.msra.mxu0 %v719
    %721 = vmatprep.subr.mxu0 0.0
    %v722 = vand.u32 %v617, 4294901760
    %v723 = vsub.f32 %v617, %v722
    %v724 = vand.u32 %v723, 4294901760
    %v725 = vsub.f32 %v723, %v724
    %v726 = vand.u32 %v725, 4294901760
    %727 = vmatpush1.xpose.msra.mxu0 %v726
    %728 = vmatprep.subr.mxu0 0.0
    %v729 = vand.u32 %v620, 4294901760
    %v730 = vsub.f32 %v620, %v729
    %v731 = vand.u32 %v730, 4294901760
    %v732 = vsub.f32 %v730, %v731
    %v733 = vand.u32 %v732, 4294901760
    %734 = vmatpush1.xpose.msra.mxu0 %v733
    %735 = vmatprep.subr.mxu0 0.0
    %v736 = vand.u32 %v623, 4294901760
    %v737 = vsub.f32 %v623, %v736
    %v738 = vand.u32 %v737, 4294901760
    %v739 = vsub.f32 %v737, %v738
    %v740 = vand.u32 %v739, 4294901760
    %741 = vmatpush1.xpose.msra.mxu0 %v740
    %742 = vmatprep.subr.mxu0 0.0
    %743 = vmatpush1.xpose.msra.mxu0 0.0
    %744 = vmatprep.subr.mxu0 0.0
    %745 = vmatpush1.xpose.msra.mxu0 0.0
    %746 = vmatprep.subr.mxu0 0.0
    %747 = vmatpush1.xpose.msra.mxu0 0.0
    %748 = vmatprep.subr.mxu0 0.0
    %749 = vmatpush1.xpose.msra.mxu0 0.0
    %750 = vmatprep.subr.mxu0 0.0
    %751 = vmatpush1.xpose.msra.mxu0 0.0
    %752 = vmatprep.subr.mxu0 0.0
    %753 = vmatpush1.xpose.msra.mxu0 0.0
    %754 = vmatprep.subr.mxu0 0.0
    %755 = vmatpush1.xpose.msra.mxu0 0.0
    %756 = vmatprep.subr.mxu0 0.0
    %757 = vmatpush1.xpose.msra.mxu0 0.0
    %758 = vmatprep.subr.mxu0 0.0
    %759 = vmatpush1.xpose.msra.mxu0 0.0
    %760 = vmatprep.subr.mxu0 0.0
    %761 = vmatpush1.xpose.msra.mxu0 0.0
    %762 = vmatprep.subr.mxu0 0.0
    %763 = vmatpush1.xpose.msra.mxu0 0.0
    %764 = vmatprep.subr.mxu0 0.0
    %765 = vmatpush1.xpose.msra.mxu0 0.0
    %766 = vmatprep.subr.mxu0 0.0
    %767 = vmatpush1.xpose.msra.mxu0 0.0
    %768 = vmatprep.subr.mxu0 0.0
    %769 = vmatpush1.xpose.msra.mxu0 0.0
    %770 = vmatprep.subr.mxu0 0.0
    %771 = vmatpush1.xpose.msra.mxu0 0.0
    %772 = vmatprep.subr.mxu0 0.0
    %773 = vmatpush1.xpose.msra.mxu0 0.0
    %774 = vmatprep.subr.mxu0 0.0
    %775 = vmatpush1.xpose.msra.mxu0 0.0
    %776 = vmatprep.subr.mxu0 0.0
    %777 = vmatpush1.xpose.msra.mxu0 0.0
    %778 = vmatprep.subr.mxu0 0.0
    %779 = vmatpush1.xpose.msra.mxu0 0.0
    %780 = vmatprep.subr.mxu0 0.0
    %781 = vmatpush1.xpose.msra.mxu0 0.0
    %782 = vmatprep.subr.mxu0 0.0
    %783 = vmatpush1.xpose.msra.mxu0 0.0
    %784 = vmatprep.subr.mxu0 0.0
    %785 = vmatpush1.xpose.msra.mxu0 0.0
    %786 = vmatprep.subr.mxu0 0.0
    %787 = vmatpush1.xpose.msra.mxu0 0.0
    %788 = vmatprep.subr.mxu0 0.0
    %789 = vmatpush1.xpose.msra.mxu0 0.0
    %790 = vmatprep.subr.mxu0 0.0
    %791 = vmatpush1.xpose.msra.mxu0 0.0
    %792 = vmatprep.subr.mxu0 0.0
    %793 = vmatpush1.xpose.msra.mxu0 0.0
    %794 = vmatprep.subr.mxu0 0.0
    %795 = vmatpush1.xpose.msra.mxu0 0.0
    %796 = vmatprep.subr.mxu0 0.0
    %797 = vmatpush1.xpose.msra.mxu0 0.0
    %798 = vmatprep.mubr.f32.mxu0 0.0
    %v799 = vand.u32 %v608, 4294901760
    %800 = vmatmul.mubr.f32.gmra.mrb[0].mxu0 %v799
    %v801 = vpop.f32.mrb[0].mxu0
    %v802 = vadd.f32 %v701, %v801
    %v803 = vpop.f32.mrb[0].mxu0
    %804 = vmatprep.mubr.f32.mxu0 0.0
    %v805 = vand.u32 %v611, 4294901760
    %806 = vmatmul.mubr.f32.gmra.mrb[0].mxu0 %v805
    %v807 = vpop.f32.mrb[0].mxu0
    %v808 = vadd.f32 %v711, %v807
    %v809 = vpop.f32.mrb[0].mxu0
    %810 = vdwg.mxu0
    %811 = vmatprep.subr.mxu0 0.0
    %v812 = vand.u32 %v614, 4294901760
    %v813 = vsub.f32 %v614, %v812
    %814 = vmatpush1.xpose.msra.mxu0 %v813
    %815 = vmatprep.subr.mxu0 0.0
    %v816 = vand.u32 %v617, 4294901760
    %v817 = vsub.f32 %v617, %v816
    %818 = vmatpush1.xpose.msra.mxu0 %v817
    %819 = vmatprep.subr.mxu0 0.0
    %v820 = vand.u32 %v620, 4294901760
    %v821 = vsub.f32 %v620, %v820
    %822 = vmatpush1.xpose.msra.mxu0 %v821
    %823 = vmatprep.subr.mxu0 0.0
    %v824 = vand.u32 %v623, 4294901760
    %v825 = vsub.f32 %v623, %v824
    %826 = vmatpush1.xpose.msra.mxu0 %v825
    %827 = vmatprep.subr.mxu0 0.0
    %828 = vmatpush1.xpose.msra.mxu0 0.0
    %829 = vmatprep.subr.mxu0 0.0
    %830 = vmatpush1.xpose.msra.mxu0 0.0
    %831 = vmatprep.subr.mxu0 0.0
    %832 = vmatpush1.xpose.msra.mxu0 0.0
    %833 = vmatprep.subr.mxu0 0.0
    %834 = vmatpush1.xpose.msra.mxu0 0.0
    %835 = vmatprep.subr.mxu0 0.0
    %836 = vmatpush1.xpose.msra.mxu0 0.0
    %837 = vmatprep.subr.mxu0 0.0
    %838 = vmatpush1.xpose.msra.mxu0 0.0
    %839 = vmatprep.subr.mxu0 0.0
    %840 = vmatpush1.xpose.msra.mxu0 0.0
    %841 = vmatprep.subr.mxu0 0.0
    %842 = vmatpush1.xpose.msra.mxu0 0.0
    %843 = vmatprep.subr.mxu0 0.0
    %844 = vmatpush1.xpose.msra.mxu0 0.0
    %845 = vmatprep.subr.mxu0 0.0
    %846 = vmatpush1.xpose.msra.mxu0 0.0
    %847 = vmatprep.subr.mxu0 0.0
    %848 = vmatpush1.xpose.msra.mxu0 0.0
    %849 = vmatprep.subr.mxu0 0.0
    %850 = vmatpush1.xpose.msra.mxu0 0.0
    %851 = vmatprep.subr.mxu0 0.0
    %852 = vmatpush1.xpose.msra.mxu0 0.0
    %853 = vmatprep.subr.mxu0 0.0
    %854 = vmatpush1.xpose.msra.mxu0 0.0
    %855 = vmatprep.subr.mxu0 0.0
    %856 = vmatpush1.xpose.msra.mxu0 0.0
    %857 = vmatprep.subr.mxu0 0.0
    %858 = vmatpush1.xpose.msra.mxu0 0.0
    %859 = vmatprep.subr.mxu0 0.0
    %860 = vmatpush1.xpose.msra.mxu0 0.0
    %861 = vmatprep.subr.mxu0 0.0
    %862 = vmatpush1.xpose.msra.mxu0 0.0
    %863 = vmatprep.subr.mxu0 0.0
    %864 = vmatpush1.xpose.msra.mxu0 0.0
    %865 = vmatprep.subr.mxu0 0.0
    %866 = vmatpush1.xpose.msra.mxu0 0.0
    %867 = vmatprep.subr.mxu0 0.0
    %868 = vmatpush1.xpose.msra.mxu0 0.0
    %869 = vmatprep.subr.mxu0 0.0
    %870 = vmatpush1.xpose.msra.mxu0 0.0
    %871 = vmatprep.subr.mxu0 0.0
    %872 = vmatpush1.xpose.msra.mxu0 0.0
    %873 = vmatprep.subr.mxu0 0.0
    %874 = vmatpush1.xpose.msra.mxu0 0.0
    %875 = vmatprep.subr.mxu0 0.0
    %876 = vmatpush1.xpose.msra.mxu0 0.0
    %877 = vmatprep.subr.mxu0 0.0
    %878 = vmatpush1.xpose.msra.mxu0 0.0
    %879 = vmatprep.subr.mxu0 0.0
    %880 = vmatpush1.xpose.msra.mxu0 0.0
    %881 = vmatprep.subr.mxu0 0.0
    %882 = vmatpush1.xpose.msra.mxu0 0.0
    %883 = vmatprep.mubr.f32.mxu0 0.0
    %v884 = vand.u32 %v608, 4294901760
    %v885 = vsub.f32 %v608, %v884
    %886 = vmatmul.mubr.f32.gmra.mrb[0].mxu0 %v885
    %v887 = vpop.f32.mrb[0].mxu0
    %v888 = vadd.f32 %v802, %v887
    %v889 = vpop.f32.mrb[0].mxu0
    %890 = vmatprep.mubr.f32.mxu0 0.0
    %v891 = vand.u32 %v611, 4294901760
    %v892 = vsub.f32 %v611, %v891
    %893 = vmatmul.mubr.f32.gmra.mrb[0].mxu0 %v892
    %v894 = vpop.f32.mrb[0].mxu0
    %v895 = vadd.f32 %v808, %v894
    %v896 = vpop.f32.mrb[0].mxu0
    %897 = vdwg.mxu0
    %898 = vmatprep.subr.mxu0 0.0
    %v899 = vand.u32 %v614, 4294901760
    %900 = vmatpush1.xpose.msra.mxu0 %v899
    %901 = vmatprep.subr.mxu0 0.0
    %v902 = vand.u32 %v617, 4294901760
    %903 = vmatpush1.xpose.msra.mxu0 %v902
    %904 = vmatprep.subr.mxu0 0.0
    %v905 = vand.u32 %v620, 4294901760
    %906 = vmatpush1.xpose.msra.mxu0 %v905
    %907 = vmatprep.subr.mxu0 0.0
    %v908 = vand.u32 %v623, 4294901760
    %909 = vmatpush1.xpose.msra.mxu0 %v908
    %910 = vmatprep.subr.mxu0 0.0
    %911 = vmatpush1.xpose.msra.mxu0 0.0
    %912 = vmatprep.subr.mxu0 0.0
    %913 = vmatpush1.xpose.msra.mxu0 0.0
    %914 = vmatprep.subr.mxu0 0.0
    %915 = vmatpush1.xpose.msra.mxu0 0.0
    %916 = vmatprep.subr.mxu0 0.0
    %917 = vmatpush1.xpose.msra.mxu0 0.0
    %918 = vmatprep.subr.mxu0 0.0
    %919 = vmatpush1.xpose.msra.mxu0 0.0
    %920 = vmatprep.subr.mxu0 0.0
    %921 = vmatpush1.xpose.msra.mxu0 0.0
    %922 = vmatprep.subr.mxu0 0.0
    %923 = vmatpush1.xpose.msra.mxu0 0.0
    %924 = vmatprep.subr.mxu0 0.0
    %925 = vmatpush1.xpose.msra.mxu0 0.0
    %926 = vmatprep.subr.mxu0 0.0
    %927 = vmatpush1.xpose.msra.mxu0 0.0
    %928 = vmatprep.subr.mxu0 0.0
    %929 = vmatpush1.xpose.msra.mxu0 0.0
    %930 = vmatprep.subr.mxu0 0.0
    %931 = vmatpush1.xpose.msra.mxu0 0.0
    %932 = vmatprep.subr.mxu0 0.0
    %933 = vmatpush1.xpose.msra.mxu0 0.0
    %934 = vmatprep.subr.mxu0 0.0
    %935 = vmatpush1.xpose.msra.mxu0 0.0
    %936 = vmatprep.subr.mxu0 0.0
    %937 = vmatpush1.xpose.msra.mxu0 0.0
    %938 = vmatprep.subr.mxu0 0.0
    %939 = vmatpush1.xpose.msra.mxu0 0.0
    %940 = vmatprep.subr.mxu0 0.0
    %941 = vmatpush1.xpose.msra.mxu0 0.0
    %942 = vmatprep.subr.mxu0 0.0
    %943 = vmatpush1.xpose.msra.mxu0 0.0
    %944 = vmatprep.subr.mxu0 0.0
    %945 = vmatpush1.xpose.msra.mxu0 0.0
    %946 = vmatprep.subr.mxu0 0.0
    %947 = vmatpush1.xpose.msra.mxu0 0.0
    %948 = vmatprep.subr.mxu0 0.0
    %949 = vmatpush1.xpose.msra.mxu0 0.0
    %950 = vmatprep.subr.mxu0 0.0
    %951 = vmatpush1.xpose.msra.mxu0 0.0
    %952 = vmatprep.subr.mxu0 0.0
    %953 = vmatpush1.xpose.msra.mxu0 0.0
    %954 = vmatprep.subr.mxu0 0.0
    %955 = vmatpush1.xpose.msra.mxu0 0.0
    %956 = vmatprep.subr.mxu0 0.0
    %957 = vmatpush1.xpose.msra.mxu0 0.0
    %958 = vmatprep.subr.mxu0 0.0
    %959 = vmatpush1.xpose.msra.mxu0 0.0
    %960 = vmatprep.subr.mxu0 0.0
    %961 = vmatpush1.xpose.msra.mxu0 0.0
    %962 = vmatprep.subr.mxu0 0.0
    %963 = vmatpush1.xpose.msra.mxu0 0.0
    %964 = vmatprep.subr.mxu0 0.0
    %965 = vmatpush1.xpose.msra.mxu0 0.0
    %966 = vmatprep.mubr.f32.mxu0 0.0
    %v967 = vand.u32 %v608, 4294901760
    %v968 = vsub.f32 %v608, %v967
    %v969 = vand.u32 %v968, 4294901760
    %970 = vmatmul.mubr.f32.gmra.mrb[0].mxu0 %v969
    %v971 = vpop.f32.mrb[0].mxu0
    %v972 = vadd.f32 %v888, %v971
    %v973 = vpop.f32.mrb[0].mxu0
    %974 = vmatprep.mubr.f32.mxu0 0.0
    %v975 = vand.u32 %v611, 4294901760
    %v976 = vsub.f32 %v611, %v975
    %v977 = vand.u32 %v976, 4294901760
    %978 = vmatmul.mubr.f32.gmra.mrb[0].mxu0 %v977
    %v979 = vpop.f32.mrb[0].mxu0
    %v980 = vadd.f32 %v895, %v979
    %v981 = vpop.f32.mrb[0].mxu0
    %982 = vdwg.mxu0
    %983 = vmatprep.subr.mxu0 0.0
    %v984 = vand.u32 %v614, 4294901760
    %v985 = vsub.f32 %v614, %v984
    %v986 = vand.u32 %v985, 4294901760
    %987 = vmatpush1.xpose.msra.mxu0 %v986
    %988 = vmatprep.subr.mxu0 0.0
    %v989 = vand.u32 %v617, 4294901760
    %v990 = vsub.f32 %v617, %v989
    %v991 = vand.u32 %v990, 4294901760
    %992 = vmatpush1.xpose.msra.mxu0 %v991
    %993 = vmatprep.subr.mxu0 0.0
    %v994 = vand.u32 %v620, 4294901760
    %v995 = vsub.f32 %v620, %v994
    %v996 = vand.u32 %v995, 4294901760
    %997 = vmatpush1.xpose.msra.mxu0 %v996
    %998 = vmatprep.subr.mxu0 0.0
    %v999 = vand.u32 %v623, 4294901760
    %v1000 = vsub.f32 %v623, %v999
    %v1001 = vand.u32 %v1000, 4294901760
    %1002 = vmatpush1.xpose.msra.mxu0 %v1001
    %1003 = vmatprep.subr.mxu0 0.0
    %1004 = vmatpush1.xpose.msra.mxu0 0.0
    %1005 = vmatprep.subr.mxu0 0.0
    %1006 = vmatpush1.xpose.msra.mxu0 0.0
    %1007 = vmatprep.subr.mxu0 0.0
    %1008 = vmatpush1.xpose.msra.mxu0 0.0
    %1009 = vmatprep.subr.mxu0 0.0
    %1010 = vmatpush1.xpose.msra.mxu0 0.0
    %1011 = vmatprep.subr.mxu0 0.0
    %1012 = vmatpush1.xpose.msra.mxu0 0.0
    %1013 = vmatprep.subr.mxu0 0.0
    %1014 = vmatpush1.xpose.msra.mxu0 0.0
    %1015 = vmatprep.subr.mxu0 0.0
    %1016 = vmatpush1.xpose.msra.mxu0 0.0
    %1017 = vmatprep.subr.mxu0 0.0
    %1018 = vmatpush1.xpose.msra.mxu0 0.0
    %1019 = vmatprep.subr.mxu0 0.0
    %1020 = vmatpush1.xpose.msra.mxu0 0.0
    %1021 = vmatprep.subr.mxu0 0.0
    %1022 = vmatpush1.xpose.msra.mxu0 0.0
    %1023 = vmatprep.subr.mxu0 0.0
    %1024 = vmatpush1.xpose.msra.mxu0 0.0
    %1025 = vmatprep.subr.mxu0 0.0
    %1026 = vmatpush1.xpose.msra.mxu0 0.0
    %1027 = vmatprep.subr.mxu0 0.0
    %1028 = vmatpush1.xpose.msra.mxu0 0.0
    %1029 = vmatprep.subr.mxu0 0.0
    %1030 = vmatpush1.xpose.msra.mxu0 0.0
    %1031 = vmatprep.subr.mxu0 0.0
    %1032 = vmatpush1.xpose.msra.mxu0 0.0
    %1033 = vmatprep.subr.mxu0 0.0
    %1034 = vmatpush1.xpose.msra.mxu0 0.0
    %1035 = vmatprep.subr.mxu0 0.0
    %1036 = vmatpush1.xpose.msra.mxu0 0.0
    %1037 = vmatprep.subr.mxu0 0.0
    %1038 = vmatpush1.xpose.msra.mxu0 0.0
    %1039 = vmatprep.subr.mxu0 0.0
    %1040 = vmatpush1.xpose.msra.mxu0 0.0
    %1041 = vmatprep.subr.mxu0 0.0
    %1042 = vmatpush1.xpose.msra.mxu0 0.0
    %1043 = vmatprep.subr.mxu0 0.0
    %1044 = vmatpush1.xpose.msra.mxu0 0.0
    %1045 = vmatprep.subr.mxu0 0.0
    %1046 = vmatpush1.xpose.msra.mxu0 0.0
    %1047 = vmatprep.subr.mxu0 0.0
    %1048 = vmatpush1.xpose.msra.mxu0 0.0
    %1049 = vmatprep.subr.mxu0 0.0
    %1050 = vmatpush1.xpose.msra.mxu0 0.0
    %1051 = vmatprep.subr.mxu0 0.0
    %1052 = vmatpush1.xpose.msra.mxu0 0.0
    %1053 = vmatprep.subr.mxu0 0.0
    %1054 = vmatpush1.xpose.msra.mxu0 0.0
    %1055 = vmatprep.subr.mxu0 0.0
    %1056 = vmatpush1.xpose.msra.mxu0 0.0
    %1057 = vmatprep.subr.mxu0 0.0
    %1058 = vmatpush1.xpose.msra.mxu0 0.0
    %1059 = vmatprep.mubr.f32.mxu0 0.0
    %v1060 = vand.u32 %v608, 4294901760
    %1061 = vmatmul.mubr.f32.gmra.mrb[0].mxu0 %v1060
    %v1062 = vpop.f32.mrb[0].mxu0
    %v1063 = vadd.f32 %v972, %v1062
    %v1064 = vpop.f32.mrb[0].mxu0
    %1065 = vmatprep.mubr.f32.mxu0 0.0
    %v1066 = vand.u32 %v611, 4294901760
    %1067 = vmatmul.mubr.f32.gmra.mrb[0].mxu0 %v1066
    %v1068 = vpop.f32.mrb[0].mxu0
    %v1069 = vadd.f32 %v980, %v1068
    %v1070 = vpop.f32.mrb[0].mxu0
    %1071 = vdwg.mxu0
    %1072 = vmatprep.subr.mxu0 0.0
    %v1073 = vand.u32 %v614, 4294901760
    %1074 = vmatpush1.xpose.msra.mxu0 %v1073
    %1075 = vmatprep.subr.mxu0 0.0
    %v1076 = vand.u32 %v617, 4294901760
    %1077 = vmatpush1.xpose.msra.mxu0 %v1076
    %1078 = vmatprep.subr.mxu0 0.0
    %v1079 = vand.u32 %v620, 4294901760
    %1080 = vmatpush1.xpose.msra.mxu0 %v1079
    %1081 = vmatprep.subr.mxu0 0.0
    %v1082 = vand.u32 %v623, 4294901760
    %1083 = vmatpush1.xpose.msra.mxu0 %v1082
    %1084 = vmatprep.subr.mxu0 0.0
    %1085 = vmatpush1.xpose.msra.mxu0 0.0
    %1086 = vmatprep.subr.mxu0 0.0
    %1087 = vmatpush1.xpose.msra.mxu0 0.0
    %1088 = vmatprep.subr.mxu0 0.0
    %1089 = vmatpush1.xpose.msra.mxu0 0.0
    %1090 = vmatprep.subr.mxu0 0.0
    %1091 = vmatpush1.xpose.msra.mxu0 0.0
    %1092 = vmatprep.subr.mxu0 0.0
    %1093 = vmatpush1.xpose.msra.mxu0 0.0
    %1094 = vmatprep.subr.mxu0 0.0
    %1095 = vmatpush1.xpose.msra.mxu0 0.0
    %1096 = vmatprep.subr.mxu0 0.0
    %1097 = vmatpush1.xpose.msra.mxu0 0.0
    %1098 = vmatprep.subr.mxu0 0.0
    %1099 = vmatpush1.xpose.msra.mxu0 0.0
    %1100 = vmatprep.subr.mxu0 0.0
    %1101 = vmatpush1.xpose.msra.mxu0 0.0
    %1102 = vmatprep.subr.mxu0 0.0
    %1103 = vmatpush1.xpose.msra.mxu0 0.0
    %1104 = vmatprep.subr.mxu0 0.0
    %1105 = vmatpush1.xpose.msra.mxu0 0.0
    %1106 = vmatprep.subr.mxu0 0.0
    %1107 = vmatpush1.xpose.msra.mxu0 0.0
    %1108 = vmatprep.subr.mxu0 0.0
    %1109 = vmatpush1.xpose.msra.mxu0 0.0
    %1110 = vmatprep.subr.mxu0 0.0
    %1111 = vmatpush1.xpose.msra.mxu0 0.0
    %1112 = vmatprep.subr.mxu0 0.0
    %1113 = vmatpush1.xpose.msra.mxu0 0.0
    %1114 = vmatprep.subr.mxu0 0.0
    %1115 = vmatpush1.xpose.msra.mxu0 0.0
    %1116 = vmatprep.subr.mxu0 0.0
    %1117 = vmatpush1.xpose.msra.mxu0 0.0
    %1118 = vmatprep.subr.mxu0 0.0
    %1119 = vmatpush1.xpose.msra.mxu0 0.0
    %1120 = vmatprep.subr.mxu0 0.0
    %1121 = vmatpush1.xpose.msra.mxu0 0.0
    %1122 = vmatprep.subr.mxu0 0.0
    %1123 = vmatpush1.xpose.msra.mxu0 0.0
    %1124 = vmatprep.subr.mxu0 0.0
    %1125 = vmatpush1.xpose.msra.mxu0 0.0
    %1126 = vmatprep.subr.mxu0 0.0
    %1127 = vmatpush1.xpose.msra.mxu0 0.0
    %1128 = vmatprep.subr.mxu0 0.0
    %1129 = vmatpush1.xpose.msra.mxu0 0.0
    %1130 = vmatprep.subr.mxu0 0.0
    %1131 = vmatpush1.xpose.msra.mxu0 0.0
    %1132 = vmatprep.subr.mxu0 0.0
    %1133 = vmatpush1.xpose.msra.mxu0 0.0
    %1134 = vmatprep.subr.mxu0 0.0
    %1135 = vmatpush1.xpose.msra.mxu0 0.0
    %1136 = vmatprep.subr.mxu0 0.0
    %1137 = vmatpush1.xpose.msra.mxu0 0.0
    %1138 = vmatprep.subr.mxu0 0.0
    %1139 = vmatpush1.xpose.msra.mxu0 0.0
    %1140 = vmatprep.mubr.f32.mxu0 0.0
    %v1141 = vand.u32 %v608, 4294901760
    %1142 = vmatmul.mubr.f32.gmra.mrb[0].mxu0 %v1141
    %v1143 = vpop.f32.mrb[0].mxu0
    %v1144 = vadd.f32 %v1063, %v1143
    %v1145 = vpop.f32.mrb[0].mxu0
    %1146 = vmatprep.mubr.f32.mxu0 0.0
    %v1147 = vand.u32 %v611, 4294901760
    %1148 = vmatmul.mubr.f32.gmra.mrb[0].mxu0 %v1147
    %v1149 = vpop.f32.mrb[0].mxu0
    %v1150 = vadd.f32 %v1069, %v1149
    %v1151 = vpop.f32.mrb[0].mxu0
    %1152 = vdwg.mxu0
    %v1155 = vunpack.c.l.s4 1966171168
    %v1156 = vunpack.c.0.s8 %v1155
    %v1157 = vlaneseq
    %v1158 = vshrl.u32 %v1157, 7
    %v1159 = vsub.s32 %v1156, %v1158
    %v1160 = vrot.slane %v598, %v1159
    %v1161 = vcombine.high %v1160, %v1160
    %v1163 = vunpack.c.l.s4 1966171168
    %v1164 = vunpack.c.0.s8 %v1163
    %v1165 = vlaneseq
    %v1166 = vshrl.u32 %v1165, 7
    %v1167 = vsub.s32 %v1164, %v1166
    %v1168 = vrot.slane %v1160, %v1167
    %v1170 = vunpack.c.l.s4 1966171168
    %v1171 = vunpack.c.0.s8 %v1170
    %v1172 = vlaneseq
    %v1173 = vshrl.u32 %v1172, 7
    %v1174 = vsub.s32 %v1171, %v1173
    %v1175 = vrot.slane %v1161, %v1174
    %v1176 = vlaneseq
    %v1177 = vshrl.u32 %v1176, 7
    %v1178 = vsub.s32 0, %v1177
    %v1179 = vrot.slane %v1168, %v1178
    %v1180 = vlaneseq
    %v1181 = vshrl.u32 %v1180, 7
    %v1182 = vsub.s32 0, %v1181
    %v1183 = vrot.slane %v1175, %v1182
    %v1186 = vadd.f32 %v1179, %v1144
    %v1187 = vadd.f32 %v1183, %v1150
    %v1188 = vtanh.pop %v1186
    %v1189 = vtanh.pop %v1187
    %v1191 = vlaneseq
    %v1192 = vshrl.u32 %v1191, 7
    %v1193 = vsub.s32 0, %v1192
    %v1194 = vrot.slane %v93, %v1193
    %v1196 = vmul.f32 %v1188, %v1194
    %v1197 = vmul.f32 %v1189, %v1194
    %v1198 = vsel %vm100, %v1196, 0.0
    %1199 = vadd.xlane.f32.xlu0 %v1198
    %v1200 = vpop.xlane.xlu0 %1199
    %v1201 = vsel %vm100, %v1197, 0.0
    %1202 = vadd.xlane.f32.xlu0 %v1201
    %v1203 = vpop.xlane.xlu0 %1202
    %v1206 = vlaneseq
    %v1207 = vand.u32 %v1206, 127
    %v1208 = vlaneseq
    %v1209 = vshrl.u32 %v1208, 7
    %v1210 = vsub.s32 %v1207, %v1209
    %v1211 = vrot.slane %v1200, %v1210
    %v1212 = vlaneseq
    %v1213 = vshrl.u32 %v1212, 7
    %v1214 = vsub.s32 %v1207, %v1213
    %v1215 = vrot.slane %v1203, %v1214
    %vm1216 = vcmask 1041409
    %v1217 = vsel %vm1216, %v1215, %v1211
    %vm1219 = vcmask 58368
    %v1220 = vsel %vm1219, %v1217, -inf
    %1221 = vmax.xlane.f32.xlu0 %v1220
    %v1222 = vpop.xlane.xlu0 %1221
    %v1224 = vlaneseq
    %v1225 = vshrl.u32 %v1224, 7
    %v1226 = vsub.s32 0, %v1225
    %v1227 = vrot.slane %v1222, %v1226
    %v1228 = vlaneseq
    %v1229 = vshrl.u32 %v1228, 7
    %v1230 = vsub.s32 1, %v1229
    %v1231 = vrot.slane %v1222, %v1230
    %v1234 = vsub.f32 %v1200, %v1227
    %v1235 = vsub.f32 %v1203, %v1231
    %v1236 = vmul.f32 %v1234, 1.442695
    %v1237 = vpow.pop %v1236
    %v1238 = vmul.f32 %v1235, 1.442695
    %v1239 = vpow.pop %v1238
    %1242 = vset.pattern.permute.xlu0 0
    %1243 = vperm.xlu0 %1242, %v1237
    %v1244 = vpop.permute.xlu0 %1243
    %1245 = vset.pattern.permute.xlu0 0
    %1246 = vperm.xlu0 %1245, %v1239
    %v1247 = vpop.permute.xlu0 %1246
    %v1248 = vlaneseq
    %v1249 = vshrl.u32 %v1248, 7
    %v1250 = vsub.s32 %v1207, %v1249
    %v1251 = vrot.slane %v1244, %v1250
    %v1252 = vlaneseq
    %v1253 = vshrl.u32 %v1252, 7
    %v1254 = vsub.s32 %v1207, %v1253
    %v1255 = vrot.slane %v1247, %v1254
    %v1256 = vsel %vm1216, %v1255, %v1251
    %v1258 = vsel %vm1219, %v1256, 0.0
    %1259 = vadd.xlane.f32.xlu0 %v1258
    %v1260 = vpop.xlane.xlu0 %1259
    %v1262 = vlaneseq
    %v1263 = vshrl.u32 %v1262, 7
    %v1264 = vsub.s32 0, %v1263
    %v1265 = vrot.slane %v1260, %v1264
    %v1266 = vlaneseq
    %v1267 = vshrl.u32 %v1266, 7
    %v1268 = vsub.s32 1, %v1267
    %v1269 = vrot.slane %v1260, %v1268
    %v1272 = vrcp.pop %v1265
    %v1273 = vmul.f32 %v1237, %v1272
    %v1274 = vrcp.pop %v1269
    %v1275 = vmul.f32 %v1239, %v1274
    %1277 = vset.pattern.permute.xlu0 0
    %1278 = vperm.xlu0 %1277, %v1273
    %v1279 = vpop.permute.xlu0 %1278
    %1282 = vset.pattern.permute.xlu0 0
    %1283 = vperm.xlu0 %1282, %v1275
    %v1284 = vpop.permute.xlu0 %1283
    %v1286 = vmul.f32 %v1279, %v81
    %v1287 = vmul.f32 %v1284, %v82
    %v1288 = vsel %vm100, %v1286, 0.0
    %v1289 = vrot.slane %v1288, 4
    %v1290 = vadd.f32 %v1288, %v1289
    %v1291 = vrot.slane %v1290, 2
    %v1292 = vadd.f32 %v1290, %v1291
    %v1293 = vrot.slane %v1292, 1
    %v1294 = vadd.f32 %v1292, %v1293
    %v1295 = vsel %vm100, %v1287, 0.0
    %v1296 = vrot.slane %v1295, 4
    %v1297 = vadd.f32 %v1295, %v1296
    %v1298 = vrot.slane %v1297, 2
    %v1299 = vadd.f32 %v1297, %v1298
    %v1300 = vrot.slane %v1299, 1
    %v1301 = vadd.f32 %v1299, %v1300
    %v1304 = vsel %vm1216, %v1301, %v1294
    %vm1306 = vcmask 254976
    %1307 = vst.msk [vmem:[#allocation10] sm:$0x3] %vm1306, %v1304
    // Predicated region
    $region46: #{tpu_custom_call.1} parent=1 // pred_check
      _
    $region47: #{tpu_custom_call.1} parent=1 // pred_check_branch
      %1309 = sbr.rel (0) target = $region49
    $region48: #{tpu_custom_call.1} parent=1 // pred_region
      %s1311 = ssub.s32 32, 32
      %1312 = vsyncadd [#allocation4], %s1311
      %s1314 = sshll.u32 [#allocation10], 4
      %s1315 = int_to_ptr.vmem [resolvable:$true] %s1314
      %1317 = dma.vmem_to_hbm [thread:$0]  %s1315, 32, %s7, [#allocation4]
    $region49: #{tpu_custom_call.1} parent=1 // pred_fallthru
      _
    // Predicated region
    $region50: #{tpu_custom_call.1} parent=1 // pred_check
      _
    $region51: #{tpu_custom_call.1} parent=1 // pred_check_branch
      %1319 = sbr.rel (0) target = $region53
    $region52: #{tpu_custom_call.1} parent=1 // pred_region
      %1320 = dma.done [#allocation4], 32
    $region53: #{tpu_custom_call.1} parent=1 // pred_fallthru
      _
    %1321 = vsyncpa [#allocation3], 1
    %1322 = vsyncpa [#allocation6], 1
    %1323 = vsyncpa [#allocation9], 1
    %1324 = vsyncpa [#allocation4], 1

</llo_original>
